<compile_context>
chip_gen: v6e
topology: v6e:2x2x1
jax: 0.10.0
libtpu: 0.0.40
codegen_flags: <defaults>
</compile_context>

<pallas_src>
import functools

import numpy as np
import jax
import jax.numpy as jnp
from jax.experimental import pallas as pl
from jax.experimental.pallas import tpu as pltpu

_BF16 = jnp.bfloat16


# ----------------------------------------------------------------------------
# Pallas kernels
# ----------------------------------------------------------------------------
def _conv_kernel(*refs, kh, kw, dil, pre_relu, post_relu, has_res):
    """Fused stride-1 conv + (pre-ReLU) + scale/shift + (residual) + (post-ReLU)."""
    n_in = 5 if has_res else 4
    x_ref, w_ref, s_ref, b_ref = refs[:4]
    r_ref = refs[4] if has_res else None
    o_ref = refs[n_in]
    acc_ref = refs[n_in + 1] if len(refs) > n_in + 1 else None

    Ho, Wo, Cout = o_ref.shape[1], o_ref.shape[2], o_ref.shape[3]
    Cin = x_ref.shape[3]

    def tap(i, j):
        patch = x_ref[0, i * dil:i * dil + Ho, j * dil:j * dil + Wo, :]
        return jnp.dot(patch.reshape(Ho * Wo, Cin), w_ref[i, j],
                       preferred_element_type=jnp.float32)

    taps = [(i, j) for i in range(kh) for j in range(kw)]
    if len(taps) == 1:
        y = tap(0, 0)
    else:
        # accumulate into VMEM scratch -> bounded live ranges, no big reg spills
        acc_ref[...] = tap(0, 0)
        for (i, j) in taps[1:]:
            acc_ref[...] += tap(i, j)
        y = acc_ref[...]

    if pre_relu:
        y = jnp.maximum(y, 0.0)
    y = y * s_ref[...] + b_ref[...]
    if has_res:
        y = y + r_ref[0].reshape(Ho * Wo, Cout).astype(jnp.float32)
    if post_relu:
        y = jnp.maximum(y, 0.0)
    o_ref[0] = y.reshape(Ho, Wo, Cout).astype(o_ref.dtype)


def _maxpool_kernel(x_ref, o_ref, *, k):
    Ho, Wo, C = o_ref.shape[1], o_ref.shape[2], o_ref.shape[3]
    acc = x_ref[0, 0:Ho, 0:Wo, :]
    for i in range(k):
        for j in range(k):
            if i == 0 and j == 0:
                continue
            acc = jnp.maximum(acc, x_ref[0, i:i + Ho, j:j + Wo, :])
    o_ref[0] = acc


def _bmm_kernel(m_ref, x_ref, o_ref):
    """out[n] = M @ x[n]  (separable bilinear upsampling pass)."""
    o_ref[0] = jnp.dot(m_ref[...], x_ref[0],
                       preferred_element_type=jnp.float32).astype(o_ref.dtype)


# ----------------------------------------------------------------------------
# Cached pallas_call builders
# ----------------------------------------------------------------------------
@functools.lru_cache(maxsize=None)
def _conv_call(N, Hp, Wp, Cin, KH, KW, Cout, dil, Ho, Wo,
               pre_relu, post_relu, has_res, out_dtype):
    kernel = functools.partial(_conv_kernel, kh=KH, kw=KW, dil=dil,
                               pre_relu=pre_relu, post_relu=post_relu,
                               has_res=has_res)
    in_specs = [pl.BlockSpec((1, Hp, Wp, Cin), lambda n: (n, 0, 0, 0)),
                pl.BlockSpec((KH, KW, Cin, Cout), lambda n: (0, 0, 0, 0)),
                pl.BlockSpec((1, Cout), lambda n: (0, 0)),
                pl.BlockSpec((1, Cout), lambda n: (0, 0))]
    if has_res:
        in_specs.append(pl.BlockSpec((1, Ho, Wo, Cout), lambda n: (n, 0, 0, 0)))
    scratch = [] if KH * KW == 1 else [pltpu.VMEM((Ho * Wo, Cout), jnp.float32)]
    return pl.pallas_call(
        kernel,
        out_shape=jax.ShapeDtypeStruct((N, Ho, Wo, Cout), out_dtype),
        grid=(N,),
        in_specs=in_specs,
        out_specs=pl.BlockSpec((1, Ho, Wo, Cout), lambda n: (n, 0, 0, 0)),
        scratch_shapes=scratch,
        compiler_params=pltpu.CompilerParams(
            dimension_semantics=("parallel",)),
    )


@functools.lru_cache(maxsize=None)
def _maxpool_call(N, Hp, Wp, C, k):
    Ho, Wo = Hp - (k - 1), Wp - (k - 1)
    return pl.pallas_call(
        functools.partial(_maxpool_kernel, k=k),
        out_shape=jax.ShapeDtypeStruct((N, Ho, Wo, C), _BF16),
        grid=(N,),
        in_specs=[pl.BlockSpec((1, Hp, Wp, C), lambda n: (n, 0, 0, 0))],
        out_specs=pl.BlockSpec((1, Ho, Wo, C), lambda n: (n, 0, 0, 0)),
        compiler_params=pltpu.CompilerParams(
            dimension_semantics=("parallel",)),
    )


@functools.lru_cache(maxsize=None)
def _bmm_call(N, M, K, D):
    return pl.pallas_call(
        _bmm_kernel,
        out_shape=jax.ShapeDtypeStruct((N, M, D), _BF16),
        grid=(N,),
        in_specs=[pl.BlockSpec((M, K), lambda n: (0, 0)),
                  pl.BlockSpec((1, K, D), lambda n: (n, 0, 0))],
        out_specs=pl.BlockSpec((1, M, D), lambda n: (n, 0, 0)),
        compiler_params=pltpu.CompilerParams(
            dimension_semantics=("parallel",)),
    )


# ----------------------------------------------------------------------------
# Op wrappers (JAX glue: padding / space-to-depth / im2col / transposes)
# ----------------------------------------------------------------------------
def _s2d_input(x, s):
    N, Hp, Wp, C = x.shape
    x = x.reshape(N, Hp // s, s, Wp // s, s, C)
    x = x.transpose(0, 1, 3, 2, 4, 5)
    return x.reshape(N, Hp // s, Wp // s, s * s * C)


def _s2d_weight(w, s):
    KH, KW, Cin, Cout = w.shape
    KHs, KWs = -(-KH // s), -(-KW // s)
    wp = jnp.pad(w, ((0, KHs * s - KH), (0, KWs * s - KW), (0, 0), (0, 0)))
    wp = wp.reshape(KHs, s, KWs, s, Cin, Cout).transpose(0, 2, 1, 3, 4, 5)
    return wp.reshape(KHs, KWs, s * s * Cin, Cout)


def _im2col(x, kh, kw, dil, ho, wo):
    cols = [x[:, i * dil:i * dil + ho, j * dil:j * dil + wo, :]
            for i in range(kh) for j in range(kw)]
    return jnp.concatenate(cols, axis=-1)


def conv2d(x, w, scale, shift, *, stride=1, padding=0, dilation=1,
           pre_relu=False, post_relu=False, residual=None, out_dtype=_BF16):
    """Fused conv (+ folded BN / bias, optional ReLUs, optional residual add)."""
    N, H, W, Cin = x.shape
    KH, KW, _, Cout = w.shape
    Ho = (H + 2 * padding - dilation * (KH - 1) - 1) // stride + 1
    Wo = (W + 2 * padding - dilation * (KW - 1) - 1) // stride + 1

    if padding > 0:
        x = jnp.pad(x, ((0, 0), (padding, padding), (padding, padding), (0, 0)))

    if stride > 1:
        assert dilation == 1  # all strided convs in PEM have dilation 1
        if KH == 1 and KW == 1:
            x = x[:, ::stride, ::stride, :]          # cheap: no taps to fold
        else:
            KHs, KWs = -(-KH // stride), -(-KW // stride)
            Hp_t = stride * max(-(-x.shape[1] // stride), Ho + KHs - 1)
            Wp_t = stride * max(-(-x.shape[2] // stride), Wo + KWs - 1)
            x = jnp.pad(x, ((0, 0), (0, Hp_t - x.shape[1]),
                            (0, Wp_t - x.shape[2]), (0, 0)))
            x = _s2d_input(x, stride)
            w = _s2d_weight(w, stride)
            KH, KW, Cin = KHs, KWs, stride * stride * Cin

    # Fold taps into the MXU contraction dim when the per-tap K would be tiny.
    if KH * KW > 1 and Cin <= 64:
        x = _im2col(x, KH, KW, dilation, Ho, Wo)
        Cin = KH * KW * Cin
        w = w.reshape(1, 1, Cin, Cout)
        KH = KW = 1
        dilation = 1

    if x.dtype != _BF16:
        x = x.astype(_BF16)
    if w.dtype != _BF16:
        w = w.astype(_BF16)

    call = _conv_call(N, x.shape[1], x.shape[2], Cin, KH, KW, Cout, dilation,
                      Ho, Wo, pre_relu, post_relu, residual is not None,
                      out_dtype)
    if residual is not None:
        return call(x, w, scale, shift, residual)
    return call(x, w, scale, shift)


def max_pool2d(x, k=3, stride=2, padding=1):
    N, H, W, C = x.shape
    x = jnp.pad(x, ((0, 0), (padding, padding), (padding, padding), (0, 0)),
                constant_values=-jnp.inf)
    out = _maxpool_call(N, H + 2 * padding, W + 2 * padding, C, k)(x)
    if stride > 1:
        out = out[:, ::stride, ::stride, :]   # single tiny tensor; negligible
    return out


@functools.lru_cache(maxsize=None)
def _interp_mat(n_in, n_out):
    """align_corners=True bilinear interpolation matrix (n_out, n_in)."""
    if n_in == 1:
        return jnp.asarray(np.ones((n_out, 1), np.float32), _BF16)
    src = np.arange(n_out, dtype=np.float64) * (n_in - 1) / (n_out - 1)
    i0 = np.clip(np.floor(src).astype(np.int64), 0, n_in - 2)
    frac = (src - i0).astype(np.float32)
    M = np.zeros((n_out, n_in), np.float32)
    M[np.arange(n_out), i0] = 1.0 - frac
    M[np.arange(n_out), i0 + 1] = frac
    return jnp.asarray(M, _BF16)


def upsample_bilinear(x, scale):
    """nn.Upsample(scale_factor=scale, mode='bilinear', align_corners=True),
    implemented separably as two small MXU matmuls (H pass, then W pass)."""
    N, H, W, C = x.shape
    Ho, Wo = H * scale, W * scale
    Ah, Aw = _interp_mat(H, Ho), _interp_mat(W, Wo)
    y = _bmm_call(N, Ho, H, W * C)(Ah, x.reshape(N, H, W * C))
    y = y.reshape(N, Ho, W, C).transpose(0, 2, 1, 3).reshape(N, W, Ho * C)
    y = _bmm_call(N, Wo, W, Ho * C)(Aw, y)
    return y.reshape(N, Wo, Ho, C).transpose(0, 2, 1, 3)


# ----------------------------------------------------------------------------
# Deterministic parameter construction
# ----------------------------------------------------------------------------
class _PGen:
    def __init__(self, seed=0):
        self.rng = np.random.default_rng(seed)

    def conv(self, kh, kw, cin, cout):
        w = self.rng.standard_normal((kh, kw, cin, cout)).astype(np.float32)
        return jnp.asarray(w / np.sqrt(kh * kw * cin)).astype(_BF16)

    def bn(self, c):
        gamma = (1.0 + 0.1 * self.rng.standard_normal(c)).astype(np.float32)
        beta = (0.1 * self.rng.standard_normal(c)).astype(np.float32)
        mean = (0.1 * self.rng.standard_normal(c)).astype(np.float32)
        var = np.abs(1.0 + 0.1 * self.rng.standard_normal(c)).astype(np.float32)
        inv = 1.0 / np.sqrt(var + 1e-5)
        scale = (gamma * inv).reshape(1, c)
        shift = (beta - mean * gamma * inv).reshape(1, c)
        return jnp.asarray(scale), jnp.asarray(shift)

    def bias(self, c):
        return jnp.asarray((0.1 * self.rng.standard_normal(c))
                           .astype(np.float32).reshape(1, c))


def _make_resnet_layer(g, inplanes, planes, blocks, ds_stride, conv2_stride,
                       dilation, padding):
    layer = []
    for b in range(blocks):
        blk = {
            "conv1": g.conv(1, 1, inplanes if b == 0 else planes * 4, planes),
            "bn1": g.bn(planes),
            "conv2": g.conv(3, 3, planes, planes),
            "bn2": g.bn(planes),
            "conv3": g.conv(1, 1, planes, planes * 4),
            "bn3": g.bn(planes * 4),
            "stride": conv2_stride if b == 0 else 1,
            "dilation": dilation,
            "padding": padding,
        }
        if b == 0:
            blk["ds_conv"] = g.conv(1, 1, inplanes, planes * 4)
            blk["ds_bn"] = g.bn(planes * 4)
            blk["ds_stride"] = ds_stride
        layer.append(blk)
    return layer


def make_params(emb_dim=128, num_class=10, seed=0):
    g = _PGen(seed)
    P = {}
    # ResNet-50 stem
    P["conv1"], P["bn1"] = g.conv(7, 7, 3, 64), g.bn(64)
    # ResNet-50 stages (with PEM's dilation/stride surgery on layer3/layer4)
    P["layer1"] = _make_resnet_layer(g, 64, 64, 3, 1, 1, 1, 1)
    P["layer2"] = _make_resnet_layer(g, 256, 128, 4, 2, 2, 1, 1)
    P["layer3"] = _make_resnet_layer(g, 512, 256, 6, 1, 1, 2, 2)
    P["layer4"] = _make_resnet_layer(g, 1024, 512, 3, 1, 1, 4, 4)
    ed, h = emb_dim, emb_dim // 2
    P["stream2"] = [
        (g.conv(3, 3, 3, 32), g.bn(32), 1, 1),
        (g.conv(3, 3, 32, 32), g.bn(32), 2, 2),
        (g.conv(3, 3, 32, 32), g.bn(32), 1, 1),
        (g.conv(3, 3, 32, 32), g.bn(32), 2, 2),
        (g.conv(3, 3, 32, 32), g.bn(32), 1, 1),
    ]
    P["block5_dimRed"] = (g.conv(1, 1, 2048, ed), g.bn(ed))
    P["block5_feats"] = [(g.conv(3, 3, ed, ed), g.bn(ed)),
                         (g.conv(3, 3, ed, ed), g.bn(ed))]
    P["layer1_dimRed"] = (g.conv(1, 1, 256, h), g.bn(h))
    # layer1_feats exists in the PyTorch module but is never used in forward().
    P["layer2_dimRed"] = (g.conv(1, 1, 512, h), g.bn(h))
    P["layer2_feats"] = [(g.conv(3, 3, h, h), g.bn(h)),
                         (g.conv(3, 3, h, h), g.bn(h))]
    P["layer3_dimRed"] = (g.conv(1, 1, 1024, h), g.bn(h))
    P["layer3_feats"] = [(g.conv(3, 3, h, h), g.bn(h)),
                         (g.conv(3, 3, h, h), g.bn(h))]
    concat_c = int(ed * 2.5 + 32)
    P["emb"] = [(g.conv(3, 3, concat_c, ed), g.bn(ed)),
                (g.conv(3, 3, ed, ed), g.bn(ed))]
    P["cls_w"] = g.conv(1, 1, ed, num_class)
    P["cls_scale"] = jnp.ones((1, num_class), jnp.float32)
    P["cls_shift"] = g.bias(num_class)
    return P


# ----------------------------------------------------------------------------
# Model forward
# ----------------------------------------------------------------------------
def _bottleneck(x, p):
    # conv -> BN -> ReLU fused; residual add + final ReLU fused into conv3.
    out = conv2d(x, p["conv1"], *p["bn1"], post_relu=True)
    out = conv2d(out, p["conv2"], *p["bn2"], stride=p["stride"],
                 padding=p["padding"], dilation=p["dilation"], post_relu=True)
    if "ds_conv" in p:
        idn = conv2d(x, p["ds_conv"], *p["ds_bn"], stride=p["ds_stride"])
    else:
        idn = x
    return conv2d(out, p["conv3"], *p["bn3"], residual=idn, post_relu=True)


def _run_layer(x, blocks):
    for p in blocks:
        x = _bottleneck(x, p)
    return x


def _head_conv(x, wp, padding=0, dilation=1):
    # PEM head blocks use Conv -> ReLU(True) -> BatchNorm order (pre_relu).
    w, (s, b) = wp
    return conv2d(x, w, s, b, padding=padding, dilation=dilation, pre_relu=True)


def _feats(x, fp):
    for wp in fp:
        x = _head_conv(x, wp, padding=1)
    return x


def pem_forward(inputs_nchw, P):
    x = jnp.transpose(inputs_nchw, (0, 2, 3, 1)).astype(_BF16)  # -> NHWC bf16

    # layer0 = conv1 + bn1 + relu + maxpool
    out = conv2d(x, P["conv1"], *P["bn1"], stride=2, padding=3, post_relu=True)
    out = max_pool2d(out, k=3, stride=2, padding=1)

    # streamTwo_feats on the raw input
    out_stream2 = x
    for (w, bn, pad, dil) in P["stream2"]:
        out_stream2 = conv2d(out_stream2, w, *bn, padding=pad, dilation=dil,
                             pre_relu=True)

    # layer1 branch (note: layer2_feats is applied, as in the original forward)
    out = _run_layer(out, P["layer1"])
    out_layer1 = _head_conv(out, P["layer1_dimRed"])
    out_layer1 = upsample_bilinear(out_layer1, 4)
    out_layer1 = _feats(out_layer1, P["layer2_feats"])

    # layer2 branch
    out = _run_layer(out, P["layer2"])
    out_layer2 = _head_conv(out, P["layer2_dimRed"])
    out_layer2 = upsample_bilinear(out_layer2, 8)
    out_layer2 = _feats(out_layer2, P["layer2_feats"])

    # layer3 branch
    out = _run_layer(out, P["layer3"])
    out_layer3 = _head_conv(out, P["layer3_dimRed"])
    out_layer3 = upsample_bilinear(out_layer3, 8)
    out_layer3 = _feats(out_layer3, P["layer3_feats"])

    # layer4 + block5
    out = _run_layer(out, P["layer4"])
    out = _head_conv(out, P["block5_dimRed"])
    out = upsample_bilinear(out, 8)
    out = _feats(out, P["block5_feats"])

    # concat (channel axis = last in NHWC, matches torch.cat(..., dim=1))
    out = jnp.concatenate([out_stream2, out_layer1, out_layer2, out_layer3, out],
                          axis=-1)
    out = _feats(out, P["emb"])
    # dropout: eval-mode identity
    # classifier: conv with bias folded into the kernel epilogue (scale=1)
    out = conv2d(out, P["cls_w"], P["cls_scale"], P["cls_shift"],
                 out_dtype=jnp.float32)
    return jnp.transpose(out, (0, 3, 1, 2))   # -> NCHW float32


# ----------------------------------------------------------------------------
if __name__ == "__main__":
    key = jax.random.PRNGKey(0)
    inputs = jax.random.normal(key, (2, 3, 32, 32), jnp.float32)  # NCHW
    params = make_params(emb_dim=128, num_class=10, seed=0)

    out = pem_forward(inputs, params)
    out = jax.block_until_ready(out)

    assert out.shape == (2, 10, 32, 32), out.shape
    assert bool(jnp.isfinite(out).all())
    print("KERNEL_OK")
</pallas_src>

<mosaic_0001>
module attributes {stable_mosaic.version = 11 : i64} {
  func.func @_conv_kernel(%arg0: i32, %arg1: memref<1x16x16x192xbf16, #tpu.memory_space<vmem>>, %arg2: memref<1x1x192x64xbf16, #tpu.memory_space<vmem>>, %arg3: memref<1x64xf32, #tpu.memory_space<vmem>>, %arg4: memref<1x64xf32, #tpu.memory_space<vmem>>, %arg5: memref<1x16x16x64xbf16, #tpu.memory_space<vmem>>) attributes {dimension_semantics = [#tpu.dimension_semantics<parallel>], iteration_bounds = array<i64: 2>, scalar_prefetch = 0 : i64, scratch_operands = 0 : i64, tpu.core_type = #tpu.core_type<tc>, window_params = [{transform_indices = @transform_0, window_bounds = array<i64: 1, 16, 16, 192>}, {pipeline_mode = #tpu.pipeline_mode<synchronous>, transform_indices = @transform_1, window_bounds = array<i64: 1, 1, 192, 64>}, {pipeline_mode = #tpu.pipeline_mode<synchronous>, transform_indices = @transform_2, window_bounds = array<i64: 1, 64>}, {pipeline_mode = #tpu.pipeline_mode<synchronous>, transform_indices = @transform_3, window_bounds = array<i64: 1, 64>}, {transform_indices = @transform_4, window_bounds = array<i64: 1, 16, 16, 64>}]} {
    %c0 = arith.constant 0 : index
    %c0_0 = arith.constant 0 : index
    %c0_1 = arith.constant 0 : index
    %c0_2 = arith.constant 0 : index
    %0 = vector.load %arg1[%c0, %c0_0, %c0_1, %c0_2] : memref<1x16x16x192xbf16, #tpu.memory_space<vmem>>, vector<1x16x16x192xbf16>
    %1 = vector.shape_cast %0 : vector<1x16x16x192xbf16> to vector<16x16x192xbf16>
    %2 = vector.shape_cast %1 : vector<16x16x192xbf16> to vector<256x192xbf16>
    %c0_3 = arith.constant 0 : index
    %c0_4 = arith.constant 0 : index
    %c0_5 = arith.constant 0 : index
    %c0_6 = arith.constant 0 : index
    %3 = vector.load %arg2[%c0_3, %c0_4, %c0_5, %c0_6] : memref<1x1x192x64xbf16, #tpu.memory_space<vmem>>, vector<1x1x192x64xbf16>
    %4 = vector.shape_cast %3 : vector<1x1x192x64xbf16> to vector<192x64xbf16>
    %cst = arith.constant dense<0.000000e+00> : vector<256x64xf32>
    %5 = tpu.matmul %2, %4, %cst {dimension_numbers = #tpu.dot_dimension_numbers<[1], [0], [0], [1], [0, 0, 1, 1], [], []>} : vector<256x192xbf16>, vector<192x64xbf16>, vector<256x64xf32> -> vector<256x64xf32>
    %c0_7 = arith.constant 0 : index
    %c0_8 = arith.constant 0 : index
    %6 = vector.load %arg3[%c0_7, %c0_8] : memref<1x64xf32, #tpu.memory_space<vmem>>, vector<1x64xf32>
    %7 = vector.broadcast %6 : vector<1x64xf32> to vector<256x64xf32>
    %8 = arith.mulf %5, %7 : vector<256x64xf32>
    %c0_9 = arith.constant 0 : index
    %c0_10 = arith.constant 0 : index
    %9 = vector.load %arg4[%c0_9, %c0_10] : memref<1x64xf32, #tpu.memory_space<vmem>>, vector<1x64xf32>
    %10 = vector.broadcast %9 : vector<1x64xf32> to vector<256x64xf32>
    %11 = arith.addf %8, %10 : vector<256x64xf32>
    %cst_11 = arith.constant 0.000000e+00 : f32
    %12 = vector.broadcast %cst_11 : f32 to vector<256x64xf32>
    %13 = arith.maximumf %11, %12 : vector<256x64xf32>
    %14 = vector.shape_cast %13 : vector<256x64xf32> to vector<16x16x64xf32>
    %15 = arith.truncf %14 : vector<16x16x64xf32> to vector<16x16x64xbf16>
    %c0_12 = arith.constant 0 : index
    %c0_13 = arith.constant 0 : index
    %c0_14 = arith.constant 0 : index
    %c0_15 = arith.constant 0 : index
    %16 = vector.load %arg5[%c0_12, %c0_13, %c0_14, %c0_15] : memref<1x16x16x64xbf16, #tpu.memory_space<vmem>>, vector<1x16x16x64xbf16>
    %17 = vector.shape_cast %16 : vector<1x16x16x64xbf16> to vector<16x16x64xbf16>
    %18 = vector.shape_cast %15 : vector<16x16x64xbf16> to vector<1x16x16x64xbf16>
    tpu.vector_store %arg5[%c0_12, %c0_13, %c0_14, %c0_15], %18 {strides = array<i32>} : memref<1x16x16x64xbf16, #tpu.memory_space<vmem>>, vector<1x16x16x64xbf16>,
    return
  }
  func.func @transform_0(%arg0: i32) -> (i32, i32, i32, i32) {
    %c0_i32 = arith.constant 0 : i32
    %c0_i32_0 = arith.constant 0 : i32
    %c0_i32_1 = arith.constant 0 : i32
    %c0_i32_2 = arith.constant 0 : i32
    return %arg0, %c0_i32, %c0_i32_0, %c0_i32_1 : i32, i32, i32, i32
  }
  func.func @transform_1(%arg0: i32) -> (i32, i32, i32, i32) {
    %c0_i32 = arith.constant 0 : i32
    %c0_i32_0 = arith.constant 0 : i32
    %c0_i32_1 = arith.constant 0 : i32
    %c0_i32_2 = arith.constant 0 : i32
    %c0_i32_3 = arith.constant 0 : i32
    return %c0_i32, %c0_i32_0, %c0_i32_1, %c0_i32_2 : i32, i32, i32, i32
  }
  func.func @transform_2(%arg0: i32) -> (i32, i32) {
    %c0_i32 = arith.constant 0 : i32
    %c0_i32_0 = arith.constant 0 : i32
    %c0_i32_1 = arith.constant 0 : i32
    return %c0_i32, %c0_i32_0 : i32, i32
  }
  func.func @transform_3(%arg0: i32) -> (i32, i32) {
    %c0_i32 = arith.constant 0 : i32
    %c0_i32_0 = arith.constant 0 : i32
    %c0_i32_1 = arith.constant 0 : i32
    return %c0_i32, %c0_i32_0 : i32, i32
  }
  func.func @transform_4(%arg0: i32) -> (i32, i32, i32, i32) {
    %c0_i32 = arith.constant 0 : i32
    %c0_i32_0 = arith.constant 0 : i32
    %c0_i32_1 = arith.constant 0 : i32
    %c0_i32_2 = arith.constant 0 : i32
    return %arg0, %c0_i32, %c0_i32_0, %c0_i32_1 : i32, i32, i32, i32
  }
}

</mosaic_0001>

<llo_original>
// kernel: tpu_custom_call.1
$region0: #{tpu_custom_call.1}
  #allocation0 [shape = 'u32[]', space=smem, size = 0x4, offset = 0x4, fixed_abs, tag = 'smem constant byte address 0x4 - core index']
  #allocation1 [shape = 'u32[144,128]{1,0:T(1,128)}', space=vmem, size = 0x12000, scoped, tag = 'internal scratch']
  %s0 = inlined_call_operand.hbm [shape: bf16[2,16,16,192], index: 0, kind: input, shape index: {}]
  %s1 = inlined_call_operand.vmem [shape: bf16[1,1,192,64], index: 1, kind: input, shape index: {}]
  %s2 = inlined_call_operand.vmem [shape: f32[1,64], index: 2, kind: input, shape index: {}]
  %s3 = inlined_call_operand.vmem [shape: f32[1,64], index: 3, kind: input, shape index: {}]
  %s4 = inlined_call_operand.hbm [shape: bf16[2,16,16,64], index: 4, kind: output, shape index: {}]
  %s5 = sld [smem:[#allocation0]]
  $region53: #{tpu_custom_call.1} parent=0
    _
  %s7 = ssub.s32 1, %s5
  %s8 = scalar_select 0, %s7, %s5
  $region1: #{tpu_custom_call.1} parent=0
    #allocation2 [shape = 'u8[262144]{0}', space=vmem, size = 0x40000, scoped, tag = 'input window, operand 0']
    #allocation3 [shape = 's32[2]{0}', space=sflag, size = 0x8, scoped, tag = 'scoped memory for tpu_custom_call.1']
    #allocation4 [shape = 's32[2]{0}', space=sflag, size = 0x8, scoped, tag = 'scoped memory for tpu_custom_call.1']
    #allocation5 [shape = 'u8[131072]{0}', space=vmem, size = 0x20000, scoped, tag = 'output window, operand 0']
    %9 = vsyncpa [#allocation3], 0
    %s10 = scalar_lea.sflag [#allocation3], 1
    %11 = vsyncpa %s10, 0
    %12 = vsyncpa [#allocation4], 0
    %s13 = scalar_lea.sflag [#allocation4], 1
    %14 = vsyncpa %s13, 0
    loop: start=0, step=1, limit=4
    $region2: #{tpu_custom_call.1} parent=1 // loop_pre_header
      _
    $region3: #{tpu_custom_call.1} parent=1 // loop_header
      %s16 = sphi 0, %s20
      %p17 = scmp.ge.s32.totalorder %s16, 4
      %s26 = sphi 0, %s28
      %s29 = sphi 0, %s26
      %s30 = sphi 0, %s29
      %s46 = sphi 0, %s30
      %s50 = sphi 0, %s50
      %s52 = sphi 0, %s50
      %s53 = sphi 0, %s52
      %s67 = sphi 0, %s53
      %s71 = sphi 0, %s71
      %s73 = sphi 0, %s71
      %s74 = sphi 0, %s73
      %s88 = sphi 0, %s74
      %s92 = sphi 0, %s92
      %s94 = sphi 0, %s92
      %s95 = sphi 0, %s94
      %s109 = sphi 0, %s95
      %s115 = sphi 0, %s117
      %s118 = sphi 0, %s115
      %s119 = sphi 0, %s118
      %s135 = sphi 0, %s119
    $region4: #{tpu_custom_call.1} parent=1 // loop_header_branch
      %19 = sbr.rel (%p17) target = $region8
    $region5: #{tpu_custom_call.1} parent=1 // loop_body
      %s21 = ssub.s32 %s16, 1
      %s22 = ssub.s32 %s16, 2
      %s23 = sadd.s32 %s16, 1
      %s24 = ssub.s32 %s16, %s23
      %p25 = scmp.eq.s32.totalorder %s24, 0
      %s27 = sadd.s32 %s26, 1
      %s28 = scalar_select %p25, %s26, %s27
      %p31 = pneg %p25
      %p32 = scmp.eq.s32.totalorder %s16, 1
      %p33 = por %p31, %p32
      %p34 = scmp.ne.s32.totalorder %s26, %s29
      %p35 = scmp.eq.s32.totalorder %s16, 0
      %p36 = por %p34, %p35
      %p37 = scmp.ne.s32.totalorder %s26, %s29
      %p38 = scmp.eq.s32.totalorder %s21, 1
      %p39 = por %p37, %p38
      %p40 = scmp.ne.s32.totalorder %s29, %s30
      %p41 = scmp.eq.s32.totalorder %s21, 0
      %p42 = por %p40, %p41
      %p43 = scmp.ne.s32.totalorder %s29, %s30
      %p44 = scmp.eq.s32.totalorder %s22, 1
      %p45 = por %p43, %p44
      %p47 = scmp.ne.s32.totalorder %s30, %s46
      %p48 = scmp.eq.s32.totalorder %s22, 0
      %p49 = por %p47, %p48
      %s51 = sadd.s32 %s50, 1
      %p54 = scmp.eq.s32.totalorder %s16, 1
      %p55 = scmp.ne.s32.totalorder %s50, %s52
      %p56 = scmp.eq.s32.totalorder %s16, 0
      %p57 = por %p55, %p56
      %p58 = scmp.ne.s32.totalorder %s50, %s52
      %p59 = scmp.eq.s32.totalorder %s21, 1
      %p60 = por %p58, %p59
      %p61 = scmp.ne.s32.totalorder %s52, %s53
      %p62 = scmp.eq.s32.totalorder %s21, 0
      %p63 = por %p61, %p62
      %p64 = scmp.ne.s32.totalorder %s52, %s53
      %p65 = scmp.eq.s32.totalorder %s22, 1
      %p66 = por %p64, %p65
      %p68 = scmp.ne.s32.totalorder %s53, %s67
      %p69 = scmp.eq.s32.totalorder %s22, 0
      %p70 = por %p68, %p69
      %s72 = sadd.s32 %s71, 1
      %p75 = scmp.eq.s32.totalorder %s16, 1
      %p76 = scmp.ne.s32.totalorder %s71, %s73
      %p77 = scmp.eq.s32.totalorder %s16, 0
      %p78 = por %p76, %p77
      %p79 = scmp.ne.s32.totalorder %s71, %s73
      %p80 = scmp.eq.s32.totalorder %s21, 1
      %p81 = por %p79, %p80
      %p82 = scmp.ne.s32.totalorder %s73, %s74
      %p83 = scmp.eq.s32.totalorder %s21, 0
      %p84 = por %p82, %p83
      %p85 = scmp.ne.s32.totalorder %s73, %s74
      %p86 = scmp.eq.s32.totalorder %s22, 1
      %p87 = por %p85, %p86
      %p89 = scmp.ne.s32.totalorder %s74, %s88
      %p90 = scmp.eq.s32.totalorder %s22, 0
      %p91 = por %p89, %p90
      %s93 = sadd.s32 %s92, 1
      %p96 = scmp.eq.s32.totalorder %s16, 1
      %p97 = scmp.ne.s32.totalorder %s92, %s94
      %p98 = scmp.eq.s32.totalorder %s16, 0
      %p99 = por %p97, %p98
      %p100 = scmp.ne.s32.totalorder %s92, %s94
      %p101 = scmp.eq.s32.totalorder %s21, 1
      %p102 = por %p100, %p101
      %p103 = scmp.ne.s32.totalorder %s94, %s95
      %p104 = scmp.eq.s32.totalorder %s21, 0
      %p105 = por %p103, %p104
      %p106 = scmp.ne.s32.totalorder %s94, %s95
      %p107 = scmp.eq.s32.totalorder %s22, 1
      %p108 = por %p106, %p107
      %p110 = scmp.ne.s32.totalorder %s95, %s109
      %p111 = scmp.eq.s32.totalorder %s22, 0
      %p112 = por %p110, %p111
      %s113 = ssub.s32 %s16, %s23
      %p114 = scmp.eq.s32.totalorder %s113, 0
      %s116 = sadd.s32 %s115, 1
      %s117 = scalar_select %p114, %s115, %s116
      %p120 = pneg %p114
      %p121 = scmp.eq.s32.totalorder %s16, 1
      %p122 = por %p120, %p121
      %p123 = scmp.ne.s32.totalorder %s115, %s118
      %p124 = scmp.eq.s32.totalorder %s16, 0
      %p125 = por %p123, %p124
      %p126 = scmp.ne.s32.totalorder %s115, %s118
      %p127 = scmp.eq.s32.totalorder %s21, 1
      %p128 = por %p126, %p127
      %p129 = scmp.ne.s32.totalorder %s118, %s119
      %p130 = scmp.eq.s32.totalorder %s21, 0
      %p131 = por %p129, %p130
      %p132 = scmp.ne.s32.totalorder %s118, %s119
      %p133 = scmp.eq.s32.totalorder %s22, 1
      %p134 = por %p132, %p133
      %p136 = scmp.ne.s32.totalorder %s119, %s135
      %p137 = scmp.eq.s32.totalorder %s22, 0
      %p138 = por %p136, %p137
      %p139 = scmp.le.s32.totalorder 1, %s16
      %p140 = scmp.lt.s32.totalorder %s16, 3
      %p141 = pnand %p139, %p140
      %p142 = pneg %p141
      // Predicated region
      $region9: #{tpu_custom_call.1} parent=5 // pred_check
        _
      $region10: #{tpu_custom_call.1} parent=5 // pred_check_branch
        %144 = sbr.rel (%p141) target = $region12
      $region11: #{tpu_custom_call.1} parent=5 // pred_region
        %s145 = ssub.s32 %s16, 1
        // Predicated region
        $region13: #{tpu_custom_call.1} parent=11 // pred_check
          %p146 = pneg %p63
        $region14: #{tpu_custom_call.1} parent=11 // pred_check_branch
          %148 = sbr.rel (%p146) target = $region16
        $region15: #{tpu_custom_call.1} parent=11 // pred_region
          _
        $region16: #{tpu_custom_call.1} parent=11 // pred_fallthru
          _
        // Predicated region
        $region17: #{tpu_custom_call.1} parent=11 // pred_check
          %p149 = pneg %p84
        $region18: #{tpu_custom_call.1} parent=11 // pred_check_branch
          %151 = sbr.rel (%p149) target = $region20
        $region19: #{tpu_custom_call.1} parent=11 // pred_region
          _
        $region20: #{tpu_custom_call.1} parent=11 // pred_fallthru
          _
        // Predicated region
        $region21: #{tpu_custom_call.1} parent=11 // pred_check
          %p152 = pneg %p105
        $region22: #{tpu_custom_call.1} parent=11 // pred_check_branch
          %154 = sbr.rel (%p152) target = $region24
        $region23: #{tpu_custom_call.1} parent=11 // pred_region
          _
        $region24: #{tpu_custom_call.1} parent=11 // pred_fallthru
          _
      $region12: #{tpu_custom_call.1} parent=5 // pred_fallthru
        _
      %p155 = scmp.lt.s32.totalorder %s16, 2
      // Predicated region
      $region25: #{tpu_custom_call.1} parent=5 // pred_check
        %p156 = pneg %p155
      $region26: #{tpu_custom_call.1} parent=5 // pred_check_branch
        %158 = sbr.rel (%p156) target = $region28
      $region27: #{tpu_custom_call.1} parent=5 // pred_region
        // Predicated region
        $region29: #{tpu_custom_call.1} parent=27 // pred_check
          %p159 = pneg %p36
        $region30: #{tpu_custom_call.1} parent=27 // pred_check_branch
          %161 = sbr.rel (%p159) target = $region32
        $region31: #{tpu_custom_call.1} parent=27 // pred_region
          %s162 = sand.u32 %s26, 1
          %s163 = scalar_lea.sflag [#allocation3], %s162
          %s164 = sand.u32 %s26, 1
          %s165 = smul.addr %s164, 256
          %s166 = scalar_lea.vmem [#allocation2], %s165
          %s168 = ssub.s32 4096, 4096
          %169 = vsyncadd %s163, %s168
          %s170 = smul.addr %s16, 64
          %s171 = smul.addr %s170, 64
          %s172 = scalar_lea.hbm %s0, %s171
          %s173 = sshll.u32 %s166, 4
          %s174 = int_to_ptr.vmem [resolvable:$true] %s173
          %179 = dma.hbm_to_vmem [thread:$0]  %s172, 4096, %s174, %s163, 128, 128, 8
        $region32: #{tpu_custom_call.1} parent=27 // pred_fallthru
          _
      $region28: #{tpu_custom_call.1} parent=5 // pred_fallthru
        _
      %p180 = scmp.le.s32.totalorder 1, %s16
      %p181 = scmp.lt.s32.totalorder %s16, 3
      %p182 = pnand %p180, %p181
      %p183 = pneg %p182
      // Predicated region
      $region33: #{tpu_custom_call.1} parent=5 // pred_check
        _
      $region34: #{tpu_custom_call.1} parent=5 // pred_check_branch
        %185 = sbr.rel (%p182) target = $region36
      $region35: #{tpu_custom_call.1} parent=5 // pred_region
        %s186 = ssub.s32 %s16, 1
        %s187 = sand.u32 %s29, 1
        %s188 = scalar_lea.sflag [#allocation3], %s187
        %s189 = sand.u32 %s29, 1
        %s190 = smul.addr %s189, 256
        %s191 = scalar_lea.vmem [#allocation2], %s190
        // Predicated region
        $region37: #{tpu_custom_call.1} parent=35 // pred_check
          %p192 = pneg %p42
        $region38: #{tpu_custom_call.1} parent=35 // pred_check_branch
          %194 = sbr.rel (%p192) target = $region40
        $region39: #{tpu_custom_call.1} parent=35 // pred_region
          %195 = dma.done %s188, 4096
        $region40: #{tpu_custom_call.1} parent=35 // pred_fallthru
          _
        %s196 = sand.u32 %s29, 1
        %s197 = scalar_lea.sflag [#allocation3], %s196
        %s198 = sand.u32 %s29, 1
        %s199 = smul.addr %s198, 256
        %s200 = scalar_lea.vmem [#allocation2], %s199
        %p201 = pneg %p42
        %p202 = pneg %p39
        %p203 = pneg %p63
        %p204 = pneg %p60
        %p205 = pneg %p84
        %p206 = pneg %p81
        %p207 = pneg %p105
        %p208 = pneg %p102
        %p209 = pneg %p131
        %p210 = pneg %p128
        %s211 = sand.u32 %s118, 1
        %s212 = scalar_lea.sflag [#allocation4], %s211
        %s213 = sand.u32 %s118, 1
        %s214 = smul.addr %s213, 128
        %s215 = scalar_lea.vmem [#allocation5], %s214
        %v217 = vld [vmem:[%s191] sm:$0xff]
        %v218 = vld [vmem:[%s191 + $0x8] sm:$0xff]
        %v219 = vld [vmem:[%s191 + $0x10] sm:$0xff]
        %v220 = vld [vmem:[%s191 + $0x18] sm:$0xff]
        %v221 = vld [vmem:[%s191 + $0x20] sm:$0xff]
        %v222 = vld [vmem:[%s191 + $0x28] sm:$0xff]
        %v223 = vld [vmem:[%s191 + $0x30] sm:$0xff]
        %v224 = vld [vmem:[%s191 + $0x38] sm:$0xff]
        %v225 = vld [vmem:[%s191 + $0x40] sm:$0xff]
        %v226 = vld [vmem:[%s191 + $0x48] sm:$0xff]
        %v227 = vld [vmem:[%s191 + $0x50] sm:$0xff]
        %v228 = vld [vmem:[%s191 + $0x58] sm:$0xff]
        %v229 = vld [vmem:[%s191 + $0x60] sm:$0xff]
        %v230 = vld [vmem:[%s191 + $0x68] sm:$0xff]
        %v231 = vld [vmem:[%s191 + $0x70] sm:$0xff]
        %v232 = vld [vmem:[%s191 + $0x78] sm:$0xff]
        %v233 = vld [vmem:[%s191 + $0x80] sm:$0xff]
        %v234 = vld [vmem:[%s191 + $0x88] sm:$0xff]
        %v235 = vld [vmem:[%s191 + $0x90] sm:$0xff]
        %v236 = vld [vmem:[%s191 + $0x98] sm:$0xff]
        %v237 = vld [vmem:[%s191 + $0xa0] sm:$0xff]
        %v238 = vld [vmem:[%s191 + $0xa8] sm:$0xff]
        %v239 = vld [vmem:[%s191 + $0xb0] sm:$0xff]
        %v240 = vld [vmem:[%s191 + $0xb8] sm:$0xff]
        %v241 = vld [vmem:[%s191 + $0xc0] sm:$0xff]
        %v242 = vld [vmem:[%s191 + $0xc8] sm:$0xff]
        %v243 = vld [vmem:[%s191 + $0xd0] sm:$0xff]
        %v244 = vld [vmem:[%s191 + $0xd8] sm:$0xff]
        %v245 = vld [vmem:[%s191 + $0xe0] sm:$0xff]
        %v246 = vld [vmem:[%s191 + $0xe8] sm:$0xff]
        %v247 = vld [vmem:[%s191 + $0xf0] sm:$0xff]
        %v248 = vld [vmem:[%s191 + $0xf8] sm:$0xff]
        %v249 = vld [vmem:[%s1] sm:$0xf]
        %v250 = vld [vmem:[%s1 + $0x4] sm:$0xf]
        %v251 = vld [vmem:[%s1 + $0x8] sm:$0xf]
        %v252 = vld [vmem:[%s1 + $0xc] sm:$0xf]
        %v253 = vld [vmem:[%s1 + $0x10] sm:$0xf]
        %v254 = vld [vmem:[%s1 + $0x14] sm:$0xf]
        %v255 = vld [vmem:[%s1 + $0x18] sm:$0xf]
        %v256 = vld [vmem:[%s1 + $0x1c] sm:$0xf]
        %v257 = vld [vmem:[%s1 + $0x20] sm:$0xf]
        %v258 = vld [vmem:[%s1 + $0x24] sm:$0xf]
        %v259 = vld [vmem:[%s1 + $0x28] sm:$0xf]
        %v260 = vld [vmem:[%s1 + $0x2c] sm:$0xf]
        %v261 = vld [vmem:[%s1 + $0x30] sm:$0xf]
        %v262 = vld [vmem:[%s1 + $0x34] sm:$0xf]
        %v263 = vld [vmem:[%s1 + $0x38] sm:$0xf]
        %v264 = vld [vmem:[%s1 + $0x3c] sm:$0xf]
        %v265 = vld [vmem:[%s1 + $0x40] sm:$0xf]
        %v266 = vld [vmem:[%s1 + $0x44] sm:$0xf]
        %v267 = vld [vmem:[%s1 + $0x48] sm:$0xf]
        %v268 = vld [vmem:[%s1 + $0x4c] sm:$0xf]
        %v269 = vld [vmem:[%s1 + $0x50] sm:$0xf]
        %v270 = vld [vmem:[%s1 + $0x54] sm:$0xf]
        %v271 = vld [vmem:[%s1 + $0x58] sm:$0xf]
        %v272 = vld [vmem:[%s1 + $0x5c] sm:$0xf]
        %v305 = vunpack.c.l.b16 %v217
        %v306 = vunpack.c.h.b16 %v217
        %v307 = vunpack.c.l.b16 %v218
        %v308 = vunpack.c.h.b16 %v218
        %v309 = vunpack.c.l.b16 %v219
        %v310 = vunpack.c.h.b16 %v219
        %v311 = vunpack.c.l.b16 %v220
        %v312 = vunpack.c.h.b16 %v220
        %v313 = vunpack.c.l.b16 %v221
        %v314 = vunpack.c.h.b16 %v221
        %v315 = vunpack.c.l.b16 %v222
        %v316 = vunpack.c.h.b16 %v222
        %v317 = vunpack.c.l.b16 %v223
        %v318 = vunpack.c.h.b16 %v223
        %v319 = vunpack.c.l.b16 %v224
        %v320 = vunpack.c.h.b16 %v224
        %v321 = vunpack.c.l.b16 %v225
        %v322 = vunpack.c.h.b16 %v225
        %v323 = vunpack.c.l.b16 %v226
        %v324 = vunpack.c.h.b16 %v226
        %v325 = vunpack.c.l.b16 %v227
        %v326 = vunpack.c.h.b16 %v227
        %v327 = vunpack.c.l.b16 %v228
        %v328 = vunpack.c.h.b16 %v228
        %v329 = vunpack.c.l.b16 %v229
        %v330 = vunpack.c.h.b16 %v229
        %v331 = vunpack.c.l.b16 %v230
        %v332 = vunpack.c.h.b16 %v230
        %v333 = vunpack.c.l.b16 %v231
        %v334 = vunpack.c.h.b16 %v231
        %v335 = vunpack.c.l.b16 %v232
        %v336 = vunpack.c.h.b16 %v232
        %v337 = vunpack.c.l.b16 %v233
        %v338 = vunpack.c.h.b16 %v233
        %v339 = vunpack.c.l.b16 %v234
        %v340 = vunpack.c.h.b16 %v234
        %v341 = vunpack.c.l.b16 %v235
        %v342 = vunpack.c.h.b16 %v235
        %v343 = vunpack.c.l.b16 %v236
        %v344 = vunpack.c.h.b16 %v236
        %v345 = vunpack.c.l.b16 %v237
        %v346 = vunpack.c.h.b16 %v237
        %v347 = vunpack.c.l.b16 %v238
        %v348 = vunpack.c.h.b16 %v238
        %v349 = vunpack.c.l.b16 %v239
        %v350 = vunpack.c.h.b16 %v239
        %v351 = vunpack.c.l.b16 %v240
        %v352 = vunpack.c.h.b16 %v240
        %v353 = vunpack.c.l.b16 %v241
        %v354 = vunpack.c.h.b16 %v241
        %v355 = vunpack.c.l.b16 %v242
        %v356 = vunpack.c.h.b16 %v242
        %v357 = vunpack.c.l.b16 %v243
        %v358 = vunpack.c.h.b16 %v243
        %v359 = vunpack.c.l.b16 %v244
        %v360 = vunpack.c.h.b16 %v244
        %v361 = vunpack.c.l.b16 %v245
        %v362 = vunpack.c.h.b16 %v245
        %v363 = vunpack.c.l.b16 %v246
        %v364 = vunpack.c.h.b16 %v246
        %v365 = vunpack.c.l.b16 %v247
        %v366 = vunpack.c.h.b16 %v247
        %v367 = vunpack.c.l.b16 %v248
        %v368 = vunpack.c.h.b16 %v248
        %v369 = vpack.c.b16 %v307, %v305
        %v370 = vpack.c.b16 %v308, %v306
        %v371 = vpack.c.b16 %v311, %v309
        %v372 = vpack.c.b16 %v312, %v310
        %v373 = vpack.c.b16 %v315, %v313
        %v374 = vpack.c.b16 %v316, %v314
        %v375 = vpack.c.b16 %v319, %v317
        %v376 = vpack.c.b16 %v320, %v318
        %v377 = vpack.c.b16 %v323, %v321
        %v378 = vpack.c.b16 %v324, %v322
        %v379 = vpack.c.b16 %v327, %v325
        %v380 = vpack.c.b16 %v328, %v326
        %v381 = vpack.c.b16 %v331, %v329
        %v382 = vpack.c.b16 %v332, %v330
        %v383 = vpack.c.b16 %v335, %v333
        %v384 = vpack.c.b16 %v336, %v334
        %v385 = vpack.c.b16 %v339, %v337
        %v386 = vpack.c.b16 %v340, %v338
        %v387 = vpack.c.b16 %v343, %v341
        %v388 = vpack.c.b16 %v344, %v342
        %v389 = vpack.c.b16 %v347, %v345
        %v390 = vpack.c.b16 %v348, %v346
        %v391 = vpack.c.b16 %v351, %v349
        %v392 = vpack.c.b16 %v352, %v350
        %v393 = vpack.c.b16 %v355, %v353
        %v394 = vpack.c.b16 %v356, %v354
        %v395 = vpack.c.b16 %v359, %v357
        %v396 = vpack.c.b16 %v360, %v358
        %v397 = vpack.c.b16 %v363, %v361
        %v398 = vpack.c.b16 %v364, %v362
        %v399 = vpack.c.b16 %v367, %v365
        %v400 = vpack.c.b16 %v368, %v366
        %v441 = vunpack.c.l.b16 %v249
        %v442 = vunpack.c.l.b16 %v250
        %v443 = vunpack.c.l.b16 %v251
        %v444 = vunpack.c.l.b16 %v252
        %v445 = vunpack.c.l.b16 %v253
        %v446 = vunpack.c.l.b16 %v254
        %v447 = vunpack.c.l.b16 %v255
        %v448 = vunpack.c.l.b16 %v256
        %v449 = vunpack.c.l.b16 %v257
        %v450 = vunpack.c.l.b16 %v258
        %v451 = vunpack.c.l.b16 %v259
        %v452 = vunpack.c.l.b16 %v260
        %v453 = vunpack.c.l.b16 %v261
        %v454 = vunpack.c.l.b16 %v262
        %v455 = vunpack.c.l.b16 %v263
        %v456 = vunpack.c.l.b16 %v264
        %v457 = vunpack.c.l.b16 %v265
        %v458 = vunpack.c.l.b16 %v266
        %v459 = vunpack.c.l.b16 %v267
        %v460 = vunpack.c.l.b16 %v268
        %v461 = vunpack.c.l.b16 %v269
        %v462 = vunpack.c.l.b16 %v270
        %v463 = vunpack.c.l.b16 %v271
        %v464 = vunpack.c.l.b16 %v272
        %v465 = vpack.c.b16 %v442, %v441
        %v466 = vpack.c.b16 %v444, %v443
        %v467 = vpack.c.b16 %v446, %v445
        %v468 = vpack.c.b16 %v448, %v447
        %v469 = vpack.c.b16 %v450, %v449
        %v470 = vpack.c.b16 %v452, %v451
        %v471 = vpack.c.b16 %v454, %v453
        %v472 = vpack.c.b16 %v456, %v455
        %v473 = vpack.c.b16 %v458, %v457
        %v474 = vpack.c.b16 %v460, %v459
        %v475 = vpack.c.b16 %v462, %v461
        %v476 = vpack.c.b16 %v464, %v463
        %vm489 = vcmask 523264
        %v491 = vsel %vm489, %v370, 0
        %v494 = vsel %vm489, %v372, 0
        %v497 = vsel %vm489, %v374, 0
        %v500 = vsel %vm489, %v376, 0
        %v503 = vsel %vm489, %v378, 0
        %v506 = vsel %vm489, %v380, 0
        %v509 = vsel %vm489, %v382, 0
        %v512 = vsel %vm489, %v384, 0
        %v515 = vsel %vm489, %v386, 0
        %v518 = vsel %vm489, %v388, 0
        %v521 = vsel %vm489, %v390, 0
        %v524 = vsel %vm489, %v392, 0
        %v527 = vsel %vm489, %v394, 0
        %v530 = vsel %vm489, %v396, 0
        %v533 = vsel %vm489, %v398, 0
        %v536 = vsel %vm489, %v400, 0
        %538 = vmatprep.subr.bf16.mxu0 0
        %539 = vmatpush1.bf16.msra.mxu0 %v472
        %540 = vmatprep.subr.bf16.mxu0 0
        %541 = vmatpush1.bf16.msra.mxu0 %v471
        %542 = vmatprep.subr.bf16.mxu0 0
        %543 = vmatpush1.bf16.msra.mxu0 %v470
        %544 = vmatprep.subr.bf16.mxu0 0
        %545 = vmatpush1.bf16.msra.mxu0 %v469
        %546 = vmatprep.subr.bf16.mxu0 0
        %547 = vmatpush1.bf16.msra.mxu0 %v468
        %548 = vmatprep.subr.bf16.mxu0 0
        %549 = vmatpush1.bf16.msra.mxu0 %v467
        %550 = vmatprep.subr.bf16.mxu0 0
        %551 = vmatpush1.bf16.msra.mxu0 %v466
        %552 = vmatprep.subr.bf16.mxu0 0
        %553 = vmatpush1.bf16.msra.mxu0 %v465
        %554 = vmatprep.subr.bf16.mxu0 0
        %555 = vmatpush2.bf16.msra.mxu0 0
        %556 = vmatprep.subr.bf16.mxu0 0
        %557 = vmatpush2.bf16.msra.mxu0 0
        %558 = vmatprep.subr.bf16.mxu0 0
        %559 = vmatpush2.bf16.msra.mxu0 0
        %560 = vmatprep.subr.bf16.mxu0 0
        %561 = vmatpush2.bf16.msra.mxu0 0
        %562 = vmatprep.subr.bf16.mxu0 0
        %563 = vmatpush2.bf16.msra.mxu0 %v476
        %564 = vmatprep.subr.bf16.mxu0 0
        %565 = vmatpush2.bf16.msra.mxu0 %v475
        %566 = vmatprep.subr.bf16.mxu0 0
        %567 = vmatpush2.bf16.msra.mxu0 %v474
        %568 = vmatprep.subr.bf16.mxu0 0
        %569 = vmatpush2.bf16.msra.mxu0 %v473
        %570 = vmatprep.mubr.bf16.mxu0 %v491
        %571 = vmatmul.mubr.bf16.gmra.mxu0 %v369
        %v572 = vpop.f32.mrf.mxu0
        %v573 = vadd.f32 0.0, %v572
        %v574 = vpop.f32.mrf.mxu0
        %v575 = vpop.f32.mrf.mxu0
        %v576 = vadd.f32 0.0, %v575
        %v577 = vpop.f32.mrf.mxu0
        %578 = vmatprep.mubr.bf16.mxu0 %v494
        %579 = vmatmul.mubr.bf16.gmra.mxu0 %v371
        %v580 = vpop.f32.mrf.mxu0
        %v581 = vadd.f32 0.0, %v580
        %v582 = vpop.f32.mrf.mxu0
        %v583 = vpop.f32.mrf.mxu0
        %v584 = vadd.f32 0.0, %v583
        %v585 = vpop.f32.mrf.mxu0
        %586 = vmatprep.mubr.bf16.mxu0 %v497
        %587 = vmatmul.mubr.bf16.gmra.mxu0 %v373
        %v588 = vpop.f32.mrf.mxu0
        %v589 = vadd.f32 0.0, %v588
        %v590 = vpop.f32.mrf.mxu0
        %v591 = vpop.f32.mrf.mxu0
        %v592 = vadd.f32 0.0, %v591
        %v593 = vpop.f32.mrf.mxu0
        %594 = vmatprep.mubr.bf16.mxu0 %v500
        %595 = vmatmul.mubr.bf16.gmra.mxu0 %v375
        %v596 = vpop.f32.mrf.mxu0
        %v597 = vadd.f32 0.0, %v596
        %v598 = vpop.f32.mrf.mxu0
        %v599 = vpop.f32.mrf.mxu0
        %v600 = vadd.f32 0.0, %v599
        %v601 = vpop.f32.mrf.mxu0
        %602 = vmatprep.mubr.bf16.mxu0 %v503
        %603 = vmatmul.mubr.bf16.gmra.mxu0 %v377
        %v604 = vpop.f32.mrf.mxu0
        %v605 = vadd.f32 0.0, %v604
        %v606 = vpop.f32.mrf.mxu0
        %v607 = vpop.f32.mrf.mxu0
        %v608 = vadd.f32 0.0, %v607
        %v609 = vpop.f32.mrf.mxu0
        %610 = vmatprep.mubr.bf16.mxu0 %v506
        %611 = vmatmul.mubr.bf16.gmra.mxu0 %v379
        %v612 = vpop.f32.mrf.mxu0
        %v613 = vadd.f32 0.0, %v612
        %v614 = vpop.f32.mrf.mxu0
        %v615 = vpop.f32.mrf.mxu0
        %v616 = vadd.f32 0.0, %v615
        %v617 = vpop.f32.mrf.mxu0
        %618 = vmatprep.mubr.bf16.mxu0 %v509
        %619 = vmatmul.mubr.bf16.gmra.mxu0 %v381
        %v620 = vpop.f32.mrf.mxu0
        %v621 = vadd.f32 0.0, %v620
        %v622 = vpop.f32.mrf.mxu0
        %v623 = vpop.f32.mrf.mxu0
        %v624 = vadd.f32 0.0, %v623
        %v625 = vpop.f32.mrf.mxu0
        %626 = vmatprep.mubr.bf16.mxu0 %v512
        %627 = vmatmul.mubr.bf16.gmra.mxu0 %v383
        %v628 = vpop.f32.mrf.mxu0
        %v629 = vadd.f32 0.0, %v628
        %v630 = vpop.f32.mrf.mxu0
        %v631 = vpop.f32.mrf.mxu0
        %v632 = vadd.f32 0.0, %v631
        %v633 = vpop.f32.mrf.mxu0
        %634 = vmatprep.mubr.bf16.mxu0 %v515
        %635 = vmatmul.mubr.bf16.gmra.mxu0 %v385
        %v636 = vpop.f32.mrf.mxu0
        %v637 = vadd.f32 0.0, %v636
        %v638 = vpop.f32.mrf.mxu0
        %v639 = vpop.f32.mrf.mxu0
        %v640 = vadd.f32 0.0, %v639
        %v641 = vpop.f32.mrf.mxu0
        %642 = vmatprep.mubr.bf16.mxu0 %v518
        %643 = vmatmul.mubr.bf16.gmra.mxu0 %v387
        %v644 = vpop.f32.mrf.mxu0
        %v645 = vadd.f32 0.0, %v644
        %v646 = vpop.f32.mrf.mxu0
        %v647 = vpop.f32.mrf.mxu0
        %v648 = vadd.f32 0.0, %v647
        %v649 = vpop.f32.mrf.mxu0
        %650 = vmatprep.mubr.bf16.mxu0 %v521
        %651 = vmatmul.mubr.bf16.gmra.mxu0 %v389
        %v652 = vpop.f32.mrf.mxu0
        %v653 = vadd.f32 0.0, %v652
        %v654 = vpop.f32.mrf.mxu0
        %v655 = vpop.f32.mrf.mxu0
        %v656 = vadd.f32 0.0, %v655
        %v657 = vpop.f32.mrf.mxu0
        %658 = vmatprep.mubr.bf16.mxu0 %v524
        %659 = vmatmul.mubr.bf16.gmra.mxu0 %v391
        %v660 = vpop.f32.mrf.mxu0
        %v661 = vadd.f32 0.0, %v660
        %v662 = vpop.f32.mrf.mxu0
        %v663 = vpop.f32.mrf.mxu0
        %v664 = vadd.f32 0.0, %v663
        %v665 = vpop.f32.mrf.mxu0
        %666 = vmatprep.mubr.bf16.mxu0 %v527
        %667 = vmatmul.mubr.bf16.gmra.mxu0 %v393
        %v668 = vpop.f32.mrf.mxu0
        %v669 = vadd.f32 0.0, %v668
        %v670 = vpop.f32.mrf.mxu0
        %v671 = vpop.f32.mrf.mxu0
        %v672 = vadd.f32 0.0, %v671
        %v673 = vpop.f32.mrf.mxu0
        %674 = vmatprep.mubr.bf16.mxu0 %v530
        %675 = vmatmul.mubr.bf16.gmra.mxu0 %v395
        %v676 = vpop.f32.mrf.mxu0
        %v677 = vadd.f32 0.0, %v676
        %v678 = vpop.f32.mrf.mxu0
        %v679 = vpop.f32.mrf.mxu0
        %v680 = vadd.f32 0.0, %v679
        %v681 = vpop.f32.mrf.mxu0
        %682 = vmatprep.mubr.bf16.mxu0 %v533
        %683 = vmatmul.mubr.bf16.gmra.mxu0 %v397
        %v684 = vpop.f32.mrf.mxu0
        %v685 = vadd.f32 0.0, %v684
        %v686 = vpop.f32.mrf.mxu0
        %v687 = vpop.f32.mrf.mxu0
        %v688 = vadd.f32 0.0, %v687
        %v689 = vpop.f32.mrf.mxu0
        %690 = vmatprep.mubr.bf16.mxu0 %v536
        %691 = vmatmul.mubr.bf16.gmra.mxu0 %v399
        %v692 = vpop.f32.mrf.mxu0
        %v693 = vadd.f32 0.0, %v692
        %v694 = vpop.f32.mrf.mxu0
        %v695 = vpop.f32.mrf.mxu0
        %v696 = vadd.f32 0.0, %v695
        %v697 = vpop.f32.mrf.mxu0
        %698 = vdwg.mxu0
        %v699 = vld [vmem:[%s2] sm:$0x1]
        %v701 = vlaneseq
        %v702 = vshrl.u32 %v701, 7
        %v703 = vsub.s32 0, %v702
        %v704 = vrot.slane %v699, %v703
        %v706 = vmul.f32 %v573, %v704
        %v707 = vmul.f32 %v576, %v704
        %v708 = vmul.f32 %v581, %v704
        %v709 = vmul.f32 %v584, %v704
        %v710 = vmul.f32 %v589, %v704
        %v711 = vmul.f32 %v592, %v704
        %v712 = vmul.f32 %v597, %v704
        %v713 = vmul.f32 %v600, %v704
        %v714 = vmul.f32 %v605, %v704
        %v715 = vmul.f32 %v608, %v704
        %v716 = vmul.f32 %v613, %v704
        %v717 = vmul.f32 %v616, %v704
        %v718 = vmul.f32 %v621, %v704
        %v719 = vmul.f32 %v624, %v704
        %v720 = vmul.f32 %v629, %v704
        %v721 = vmul.f32 %v632, %v704
        %v722 = vmul.f32 %v637, %v704
        %v723 = vmul.f32 %v640, %v704
        %v724 = vmul.f32 %v645, %v704
        %v725 = vmul.f32 %v648, %v704
        %v726 = vmul.f32 %v653, %v704
        %v727 = vmul.f32 %v656, %v704
        %v728 = vmul.f32 %v661, %v704
        %v729 = vmul.f32 %v664, %v704
        %v730 = vmul.f32 %v669, %v704
        %v731 = vmul.f32 %v672, %v704
        %v732 = vmul.f32 %v677, %v704
        %v733 = vmul.f32 %v680, %v704
        %v734 = vmul.f32 %v685, %v704
        %v735 = vmul.f32 %v688, %v704
        %v736 = vmul.f32 %v693, %v704
        %v737 = vmul.f32 %v696, %v704
        %v738 = vld [vmem:[%s3] sm:$0x1]
        %v740 = vlaneseq
        %v741 = vshrl.u32 %v740, 7
        %v742 = vsub.s32 0, %v741
        %v743 = vrot.slane %v738, %v742
        %v745 = vadd.f32 %v706, %v743
        %v746 = vadd.f32 %v707, %v743
        %v747 = vadd.f32 %v708, %v743
        %v748 = vadd.f32 %v709, %v743
        %v749 = vadd.f32 %v710, %v743
        %v750 = vadd.f32 %v711, %v743
        %v751 = vadd.f32 %v712, %v743
        %v752 = vadd.f32 %v713, %v743
        %v753 = vadd.f32 %v714, %v743
        %v754 = vadd.f32 %v715, %v743
        %v755 = vadd.f32 %v716, %v743
        %v756 = vadd.f32 %v717, %v743
        %v757 = vadd.f32 %v718, %v743
        %v758 = vadd.f32 %v719, %v743
        %v759 = vadd.f32 %v720, %v743
        %v760 = vadd.f32 %v721, %v743
        %v761 = vadd.f32 %v722, %v743
        %v762 = vadd.f32 %v723, %v743
        %v763 = vadd.f32 %v724, %v743
        %v764 = vadd.f32 %v725, %v743
        %v765 = vadd.f32 %v726, %v743
        %v766 = vadd.f32 %v727, %v743
        %v767 = vadd.f32 %v728, %v743
        %v768 = vadd.f32 %v729, %v743
        %v769 = vadd.f32 %v730, %v743
        %v770 = vadd.f32 %v731, %v743
        %v771 = vadd.f32 %v732, %v743
        %v772 = vadd.f32 %v733, %v743
        %v773 = vadd.f32 %v734, %v743
        %v774 = vadd.f32 %v735, %v743
        %v775 = vadd.f32 %v736, %v743
        %v776 = vadd.f32 %v737, %v743
        %v777 = vmax.f32 %v745, 0.0
        %v778 = vmax.f32 %v746, 0.0
        %v779 = vmax.f32 %v747, 0.0
        %v780 = vmax.f32 %v748, 0.0
        %v781 = vmax.f32 %v749, 0.0
        %v782 = vmax.f32 %v750, 0.0
        %v783 = vmax.f32 %v751, 0.0
        %v784 = vmax.f32 %v752, 0.0
        %v785 = vmax.f32 %v753, 0.0
        %v786 = vmax.f32 %v754, 0.0
        %v787 = vmax.f32 %v755, 0.0
        %v788 = vmax.f32 %v756, 0.0
        %v789 = vmax.f32 %v757, 0.0
        %v790 = vmax.f32 %v758, 0.0
        %v791 = vmax.f32 %v759, 0.0
        %v792 = vmax.f32 %v760, 0.0
        %v793 = vmax.f32 %v761, 0.0
        %v794 = vmax.f32 %v762, 0.0
        %v795 = vmax.f32 %v763, 0.0
        %v796 = vmax.f32 %v764, 0.0
        %v797 = vmax.f32 %v765, 0.0
        %v798 = vmax.f32 %v766, 0.0
        %v799 = vmax.f32 %v767, 0.0
        %v800 = vmax.f32 %v768, 0.0
        %v801 = vmax.f32 %v769, 0.0
        %v802 = vmax.f32 %v770, 0.0
        %v803 = vmax.f32 %v771, 0.0
        %v804 = vmax.f32 %v772, 0.0
        %v805 = vmax.f32 %v773, 0.0
        %v806 = vmax.f32 %v774, 0.0
        %v807 = vmax.f32 %v775, 0.0
        %v808 = vmax.f32 %v776, 0.0
        %v809 = vpack.c.bf16 %v778, %v777
        %v810 = vpack.c.bf16 %v780, %v779
        %v811 = vpack.c.bf16 %v782, %v781
        %v812 = vpack.c.bf16 %v784, %v783
        %v813 = vpack.c.bf16 %v786, %v785
        %v814 = vpack.c.bf16 %v788, %v787
        %v815 = vpack.c.bf16 %v790, %v789
        %v816 = vpack.c.bf16 %v792, %v791
        %v817 = vpack.c.bf16 %v794, %v793
        %v818 = vpack.c.bf16 %v796, %v795
        %v819 = vpack.c.bf16 %v798, %v797
        %v820 = vpack.c.bf16 %v800, %v799
        %v821 = vpack.c.bf16 %v802, %v801
        %v822 = vpack.c.bf16 %v804, %v803
        %v823 = vpack.c.bf16 %v806, %v805
        %v824 = vpack.c.bf16 %v808, %v807
        %v841 = vunpack.c.l.b16 %v809
        %v842 = vunpack.c.h.b16 %v809
        %v843 = vunpack.c.l.b16 %v810
        %v844 = vunpack.c.h.b16 %v810
        %v845 = vunpack.c.l.b16 %v811
        %v846 = vunpack.c.h.b16 %v811
        %v847 = vunpack.c.l.b16 %v812
        %v848 = vunpack.c.h.b16 %v812
        %v849 = vunpack.c.l.b16 %v813
        %v850 = vunpack.c.h.b16 %v813
        %v851 = vunpack.c.l.b16 %v814
        %v852 = vunpack.c.h.b16 %v814
        %v853 = vunpack.c.l.b16 %v815
        %v854 = vunpack.c.h.b16 %v815
        %v855 = vunpack.c.l.b16 %v816
        %v856 = vunpack.c.h.b16 %v816
        %v857 = vunpack.c.l.b16 %v817
        %v858 = vunpack.c.h.b16 %v817
        %v859 = vunpack.c.l.b16 %v818
        %v860 = vunpack.c.h.b16 %v818
        %v861 = vunpack.c.l.b16 %v819
        %v862 = vunpack.c.h.b16 %v819
        %v863 = vunpack.c.l.b16 %v820
        %v864 = vunpack.c.h.b16 %v820
        %v865 = vunpack.c.l.b16 %v821
        %v866 = vunpack.c.h.b16 %v821
        %v867 = vunpack.c.l.b16 %v822
        %v868 = vunpack.c.h.b16 %v822
        %v869 = vunpack.c.l.b16 %v823
        %v870 = vunpack.c.h.b16 %v823
        %v871 = vunpack.c.l.b16 %v824
        %v872 = vunpack.c.h.b16 %v824
        %v873 = vpack.c.b16 %v841, %v841
        %v874 = vpack.c.b16 %v842, %v842
        %v875 = vpack.c.b16 %v843, %v843
        %v876 = vpack.c.b16 %v844, %v844
        %v877 = vpack.c.b16 %v845, %v845
        %v878 = vpack.c.b16 %v846, %v846
        %v879 = vpack.c.b16 %v847, %v847
        %v880 = vpack.c.b16 %v848, %v848
        %v881 = vpack.c.b16 %v849, %v849
        %v882 = vpack.c.b16 %v850, %v850
        %v883 = vpack.c.b16 %v851, %v851
        %v884 = vpack.c.b16 %v852, %v852
        %v885 = vpack.c.b16 %v853, %v853
        %v886 = vpack.c.b16 %v854, %v854
        %v887 = vpack.c.b16 %v855, %v855
        %v888 = vpack.c.b16 %v856, %v856
        %v889 = vpack.c.b16 %v857, %v857
        %v890 = vpack.c.b16 %v858, %v858
        %v891 = vpack.c.b16 %v859, %v859
        %v892 = vpack.c.b16 %v860, %v860
        %v893 = vpack.c.b16 %v861, %v861
        %v894 = vpack.c.b16 %v862, %v862
        %v895 = vpack.c.b16 %v863, %v863
        %v896 = vpack.c.b16 %v864, %v864
        %v897 = vpack.c.b16 %v865, %v865
        %v898 = vpack.c.b16 %v866, %v866
        %v899 = vpack.c.b16 %v867, %v867
        %v900 = vpack.c.b16 %v868, %v868
        %v901 = vpack.c.b16 %v869, %v869
        %v902 = vpack.c.b16 %v870, %v870
        %v903 = vpack.c.b16 %v871, %v871
        %v904 = vpack.c.b16 %v872, %v872
        %vm937 = vcmask 519168
        %938 = vst.msk [vmem:[%s215] sm:$0xf] %vm937, %v873
        %939 = vst.msk [vmem:[%s215 + $0x4] sm:$0xf] %vm937, %v874
        %940 = vst.msk [vmem:[%s215 + $0x8] sm:$0xf] %vm937, %v875
        %941 = vst.msk [vmem:[%s215 + $0xc] sm:$0xf] %vm937, %v876
        %942 = vst.msk [vmem:[%s215 + $0x10] sm:$0xf] %vm937, %v877
        %943 = vst.msk [vmem:[%s215 + $0x14] sm:$0xf] %vm937, %v878
        %944 = vst.msk [vmem:[%s215 + $0x18] sm:$0xf] %vm937, %v879
        %945 = vst.msk [vmem:[%s215 + $0x1c] sm:$0xf] %vm937, %v880
        %946 = vst.msk [vmem:[%s215 + $0x20] sm:$0xf] %vm937, %v881
        %947 = vst.msk [vmem:[%s215 + $0x24] sm:$0xf] %vm937, %v882
        %948 = vst.msk [vmem:[%s215 + $0x28] sm:$0xf] %vm937, %v883
        %949 = vst.msk [vmem:[%s215 + $0x2c] sm:$0xf] %vm937, %v884
        %950 = vst.msk [vmem:[%s215 + $0x30] sm:$0xf] %vm937, %v885
        %951 = vst.msk [vmem:[%s215 + $0x34] sm:$0xf] %vm937, %v886
        %952 = vst.msk [vmem:[%s215 + $0x38] sm:$0xf] %vm937, %v887
        %953 = vst.msk [vmem:[%s215 + $0x3c] sm:$0xf] %vm937, %v888
        %954 = vst.msk [vmem:[%s215 + $0x40] sm:$0xf] %vm937, %v889
        %955 = vst.msk [vmem:[%s215 + $0x44] sm:$0xf] %vm937, %v890
        %956 = vst.msk [vmem:[%s215 + $0x48] sm:$0xf] %vm937, %v891
        %957 = vst.msk [vmem:[%s215 + $0x4c] sm:$0xf] %vm937, %v892
        %958 = vst.msk [vmem:[%s215 + $0x50] sm:$0xf] %vm937, %v893
        %959 = vst.msk [vmem:[%s215 + $0x54] sm:$0xf] %vm937, %v894
        %960 = vst.msk [vmem:[%s215 + $0x58] sm:$0xf] %vm937, %v895
        %961 = vst.msk [vmem:[%s215 + $0x5c] sm:$0xf] %vm937, %v896
        %962 = vst.msk [vmem:[%s215 + $0x60] sm:$0xf] %vm937, %v897
        %963 = vst.msk [vmem:[%s215 + $0x64] sm:$0xf] %vm937, %v898
        %964 = vst.msk [vmem:[%s215 + $0x68] sm:$0xf] %vm937, %v899
        %965 = vst.msk [vmem:[%s215 + $0x6c] sm:$0xf] %vm937, %v900
        %966 = vst.msk [vmem:[%s215 + $0x70] sm:$0xf] %vm937, %v901
        %967 = vst.msk [vmem:[%s215 + $0x74] sm:$0xf] %vm937, %v902
        %968 = vst.msk [vmem:[%s215 + $0x78] sm:$0xf] %vm937, %v903
        %969 = vst.msk [vmem:[%s215 + $0x7c] sm:$0xf] %vm937, %v904
        %s970 = sand.u32 %s118, 1
        %s971 = scalar_lea.sflag [#allocation4], %s970
        %s972 = sand.u32 %s118, 1
        %s973 = smul.addr %s972, 128
        %s974 = scalar_lea.vmem [#allocation5], %s973
        // Predicated region
        $region41: #{tpu_custom_call.1} parent=35 // pred_check
          %p975 = pneg %p128
        $region42: #{tpu_custom_call.1} parent=35 // pred_check_branch
          %977 = sbr.rel (%p975) target = $region44
        $region43: #{tpu_custom_call.1} parent=35 // pred_region
          %s979 = ssub.s32 2048, 2048
          %980 = vsyncadd %s971, %s979
          %s981 = smul.addr %s21, 32
          %s982 = smul.addr %s981, 64
          %s983 = scalar_lea.hbm %s4, %s982
          %s984 = sshll.u32 %s974, 4
          %s985 = int_to_ptr.vmem [resolvable:$true] %s984
          %990 = dma.vmem_to_hbm [thread:$0]  %s985, 2048, %s983, %s971, 64, 64, 4
        $region44: #{tpu_custom_call.1} parent=35 // pred_fallthru
          _
      $region36: #{tpu_custom_call.1} parent=5 // pred_fallthru
        _
      %p991 = scmp.le.s32.totalorder 2, %s16
      // Predicated region
      $region45: #{tpu_custom_call.1} parent=5 // pred_check
        %p992 = pneg %p991
      $region46: #{tpu_custom_call.1} parent=5 // pred_check_branch
        %994 = sbr.rel (%p992) target = $region48
      $region47: #{tpu_custom_call.1} parent=5 // pred_region
        %s995 = ssub.s32 %s16, 2
        // Predicated region
        $region49: #{tpu_custom_call.1} parent=47 // pred_check
          %p996 = pneg %p134
        $region50: #{tpu_custom_call.1} parent=47 // pred_check_branch
          %998 = sbr.rel (%p996) target = $region52
        $region51: #{tpu_custom_call.1} parent=47 // pred_region
          %s999 = sand.u32 %s119, 1
          %s1000 = scalar_lea.sflag [#allocation4], %s999
          %s1001 = sand.u32 %s119, 1
          %s1002 = smul.addr %s1001, 128
          %s1003 = scalar_lea.vmem [#allocation5], %s1002
          %1004 = dma.done %s1000, 2048
        $region52: #{tpu_custom_call.1} parent=47 // pred_fallthru
          _
      $region48: #{tpu_custom_call.1} parent=5 // pred_fallthru
        _
    $region6: #{tpu_custom_call.1} parent=1 // loop_footer
      %s20 = sadd.s32 1, %s16
    $region7: #{tpu_custom_call.1} parent=1 // loop_footer_branch
      %15 = sbr.rel target = $region3
    $region8: #{tpu_custom_call.1} parent=1 // loop_exit
      _
    %1005 = vsyncpa [#allocation3], 1
    %s1006 = scalar_lea.sflag [#allocation3], 1
    %1007 = vsyncpa %s1006, 1
    %1008 = vsyncpa [#allocation4], 1
    %s1009 = scalar_lea.sflag [#allocation4], 1
    %1010 = vsyncpa %s1009, 1

</llo_original>
